<compile_context>
chip_gen: v6e
topology: v6e:2x2x1
jax: 0.10.0
libtpu: 0.0.40
codegen_flags: <defaults>
</compile_context>

<pallas_src>
import functools

import jax
import jax.numpy as jnp
from jax.experimental import pallas as pl
from jax.experimental.pallas import tpu as pltpu


def _affine_coupling_kernel(*refs, n_layers: int, reverse: bool):
    """refs = (x1t, x2t, [fused W, fused b] * n_layers, y2t[, ld_row]).

    Everything is in the transposed domain: features on sublanes, batch on
    lanes.  Fused weights are torch-layout (out_features, in_features) with
    scale-net and shift-net stacked/block-diagonal along the feature axes.
    """
    x1t_ref, x2t_ref = refs[0], refs[1]
    w_refs = refs[2:2 + 2 * n_layers]
    y2t_ref = refs[2 + 2 * n_layers]
    ld_ref = None if reverse else refs[3 + 2 * n_layers]

    out_dim = y2t_ref.shape[0]
    cdt = w_refs[0].dtype                       # matmul compute dtype (f32 or bf16)

    # Single fused (scale ++ shift) MLP chain; h is (features, tb).
    h = x1t_ref[...].astype(cdt)
    for li in range(n_layers):
        w = w_refs[2 * li][...]                          # (out_f, in_f), cdt
        b = w_refs[2 * li + 1][...]                      # (out_f, 1), f32
        h = jnp.dot(w, h, preferred_element_type=jnp.float32) + b
        if li == n_layers - 1:
            h = jnp.tanh(h)                              # f32 tail
        else:
            h = jnp.maximum(h, 0.0).astype(cdt)

    log_s = h[:out_dim, :]                               # (out_dim, tb), f32
    t = h[out_dim:, :]
    s = jnp.exp(log_s)
    x2t = x2t_ref[...].astype(jnp.float32)

    if reverse:
        # Module literally computes (x2 - t) / s**(-1) == (x2 - t) * s; keep it.
        y2t = (x2t - t) * s
    else:
        y2t = s * x2t + t
        # Per-row log-det: sublane reduction -> naturally lane-dense (1, tb).
        ld_ref[...] = jnp.sum(log_s, axis=0, keepdims=True)

    y2t_ref[...] = y2t.astype(y2t_ref.dtype)


def affine_coupling_forward(x, log_det_J, scale_params, shift_params, *,
                            mask_config: int, reverse: bool = False,
                            block_batch: int = 1024):
    """Apply the AffineCoupling layer.

    scale_params / shift_params: lists of (W, b) with W in torch nn.Linear
    layout (out_features, in_features) and b of shape (out_features,).
    Returns (y, log_det_J) matching the PyTorch module.
    """
    B, D = x.shape
    x1 = x[:, mask_config::2]                 # layout plumbing, stays in XLA
    x2 = x[:, 1 - mask_config::2]
    in_dim = x1.shape[1]
    out_dim = x2.shape[1]
    n_layers = len(scale_params)
    assert len(shift_params) == n_layers

    compute_dtype = jnp.bfloat16 if x.dtype == jnp.bfloat16 else jnp.float32

    # ---- Fuse the two nets into one MLP (built once, outside the kernel). ----
    # Layer 0: stack along out-features; layers 1..: block-diagonal.
    fused = []
    for li in range(n_layers):
        ws, bs = scale_params[li]
        wt, bt = shift_params[li]
        ws = jnp.asarray(ws); wt = jnp.asarray(wt)
        bs = jnp.asarray(bs).reshape(-1); bt = jnp.asarray(bt).reshape(-1)
        if li == 0:
            w = jnp.concatenate([ws, wt], axis=0)                      # (2*mid, in_dim)
        else:
            zs = jnp.zeros((ws.shape[0], wt.shape[1]), ws.dtype)
            zt = jnp.zeros((wt.shape[0], ws.shape[1]), wt.dtype)
            w = jnp.concatenate(
                [jnp.concatenate([ws, zs], axis=1),
                 jnp.concatenate([zt, wt], axis=1)], axis=0)           # block-diag
        b = jnp.concatenate([bs, bt], axis=0).reshape(-1, 1)
        fused.append(w.astype(compute_dtype))
        fused.append(b.astype(jnp.float32))

    # ---- Transposed activations: features on sublanes, batch on lanes. ----
    x1t = x1.T                                # (in_dim, B)
    x2t = x2.T                                # (out_dim, B)

    # Batch tile on the lane axis: multiple of 128 (or the full batch), at
    # least 2 tiles whenever possible so v7x's two TensorCores both get work.
    if B <= 128:
        tb = B
    else:
        tb = min(block_batch, max(128, ((pl.cdiv(B, 2) + 127) // 128) * 128))
    grid_b = pl.cdiv(B, tb)                   # ragged last tile handled by Pallas

    def param_spec(a):
        return pl.BlockSpec(a.shape, lambda i: (0, 0))   # whole (small) param every tile

    in_specs = [
        pl.BlockSpec((in_dim, tb), lambda i: (0, i)),
        pl.BlockSpec((out_dim, tb), lambda i: (0, i)),
    ] + [param_spec(a) for a in fused]

    out_shape = [jax.ShapeDtypeStruct((out_dim, B), x.dtype)]
    out_specs = [pl.BlockSpec((out_dim, tb), lambda i: (0, i))]
    if not reverse:
        out_shape.append(jax.ShapeDtypeStruct((1, B), jnp.float32))
        out_specs.append(pl.BlockSpec((1, tb), lambda i: (0, i)))

    # VMEM budget from actual tile / parameter sizes (double-buffered pipelines
    # + f32 temporaries), clamped to stay inside v7x's 64 MiB.
    itemsize = x.dtype.itemsize
    io_tile_bytes = (in_dim + 2 * out_dim) * tb * itemsize + tb * 4
    param_bytes = sum(int(a.size) * a.dtype.itemsize for a in fused)
    widest = max(int(w.shape[0]) for w in fused[0::2])
    scratch_bytes = 4 * widest * tb * 4
    needed = 2 * (io_tile_bytes + param_bytes) + scratch_bytes
    vmem_limit = int(min(max(2 * needed, 16 * 2 ** 20), 64 * 2 ** 20))

    kernel = functools.partial(_affine_coupling_kernel,
                               n_layers=n_layers, reverse=reverse)

    outs = pl.pallas_call(
        kernel,
        out_shape=tuple(out_shape),
        grid=(grid_b,),
        in_specs=in_specs,
        out_specs=tuple(out_specs),
        compiler_params=pltpu.CompilerParams(
            dimension_semantics=("parallel",),        # batch tiles independent
            vmem_limit_bytes=vmem_limit,
        ),
    )(x1t, x2t, *fused)

    y2t = outs[0]
    y2 = y2t.T                                       # back to (B, out_dim) in XLA
    ordered = (x1, y2) if mask_config == 0 else (y2, x1)
    y = jnp.stack(ordered, axis=2).reshape(B, D)     # re-interleave, stays in XLA

    if reverse:
        return y, log_det_J                          # module does not update it
    ld_sum = outs[1]
    return y, (log_det_J + ld_sum[0, :]).astype(log_det_J.dtype)


if __name__ == "__main__":
    in_out_dim = 32
    mid_dim = 64
    hidden = 2              # -> hidden + 1 = 3 Linear layers per net
    mask_config = 0

    input_dim = in_out_dim // 2 + (in_out_dim % 2 > 0) * mask_config
    output_dim = in_out_dim // 2 + (in_out_dim % 2 > 0) * (1 - mask_config)
    dims = [input_dim] + [mid_dim] * hidden + [output_dim]
    n_lin = hidden + 1

    key = jax.random.PRNGKey(0)
    keys = jax.random.split(key, 4 * n_lin + 3)

    def make_net(ks):
        params = []
        for li, (din, dout) in enumerate(zip(dims[:-1], dims[1:])):
            w = 0.3 * jax.random.normal(ks[2 * li], (dout, din), dtype=jnp.float32)
            b = 0.1 * jax.random.normal(ks[2 * li + 1], (dout,), dtype=jnp.float32)
            params.append((w, b))
        return params

    scale_params = make_net(keys[:2 * n_lin])
    shift_params = make_net(keys[2 * n_lin:4 * n_lin])

    # Plain-JAX reference mirroring the PyTorch module exactly.
    def net_ref(params, h):
        for i, (w, b) in enumerate(params):
            h = h @ w.T + b
            h = jnp.tanh(h) if i == len(params) - 1 else jnp.maximum(h, 0.0)
        return h

    def ref(xx, ld, reverse):
        x1 = xx[:, mask_config::2]
        x2 = xx[:, 1 - mask_config::2]
        log_s = net_ref(scale_params, x1)
        s = jnp.exp(log_s)
        t = net_ref(shift_params, x1)
        if reverse:
            x2n = (x2 - t) / s ** (-1)
            ld_o = ld
        else:
            x2n = s * x2 + t
            ld_o = ld + jnp.sum(log_s, axis=1)
        ordered = (x1, x2n) if mask_config == 0 else (x2n, x1)
        return jnp.stack(ordered, axis=2).reshape(xx.shape), ld_o

    def check(batch, kx):
        x = jax.random.normal(kx, (batch, in_out_dim), dtype=jnp.float32)
        ld0 = jnp.zeros((batch,), dtype=jnp.float32)
        y_f, ld_f = affine_coupling_forward(x, ld0, scale_params, shift_params,
                                            mask_config=mask_config, reverse=False)
        y_r, ld_r = affine_coupling_forward(x, ld0, scale_params, shift_params,
                                            mask_config=mask_config, reverse=True)
        jax.block_until_ready((y_f, ld_f, y_r, ld_r))
        y_f_ref, ld_f_ref = ref(x, ld0, False)
        y_r_ref, ld_r_ref = ref(x, ld0, True)
        assert jnp.allclose(y_f, y_f_ref, rtol=1e-3, atol=1e-3)
        assert jnp.allclose(ld_f, ld_f_ref, rtol=1e-3, atol=1e-3)
        assert jnp.allclose(y_r, y_r_ref, rtol=1e-3, atol=1e-3)
        assert jnp.allclose(ld_r, ld_r_ref, rtol=1e-3, atol=1e-3)

    check(8, keys[-2])      # single tile (batch on lanes == full array dim)
    check(200, keys[-1])    # two lane tiles of 128 with a ragged last tile

    print("KERNEL_OK")
</pallas_src>

<mosaic_0001>
module attributes {stable_mosaic.version = 11 : i64} {
  func.func @_affine_coupling_kernel(%arg0: i32, %arg1: memref<16x8xf32, #tpu.memory_space<vmem>>, %arg2: memref<16x8xf32, #tpu.memory_space<vmem>>, %arg3: memref<128x16xf32, #tpu.memory_space<vmem>>, %arg4: memref<128x1xf32, #tpu.memory_space<vmem>>, %arg5: memref<128x128xf32, #tpu.memory_space<vmem>>, %arg6: memref<128x1xf32, #tpu.memory_space<vmem>>, %arg7: memref<32x128xf32, #tpu.memory_space<vmem>>, %arg8: memref<32x1xf32, #tpu.memory_space<vmem>>, %arg9: memref<16x8xf32, #tpu.memory_space<vmem>>, %arg10: memref<1x8xf32, #tpu.memory_space<vmem>>) attributes {dimension_semantics = [#tpu.dimension_semantics<parallel>], iteration_bounds = array<i64: 1>, scalar_prefetch = 0 : i64, scratch_operands = 0 : i64, tpu.core_type = #tpu.core_type<tc>, window_params = [{transform_indices = @transform_0, window_bounds = array<i64: 16, 8>}, {transform_indices = @transform_1, window_bounds = array<i64: 16, 8>}, {pipeline_mode = #tpu.pipeline_mode<synchronous>, transform_indices = @transform_2, window_bounds = array<i64: 128, 16>}, {pipeline_mode = #tpu.pipeline_mode<synchronous>, transform_indices = @transform_3, window_bounds = array<i64: 128, 1>}, {pipeline_mode = #tpu.pipeline_mode<synchronous>, transform_indices = @transform_4, window_bounds = array<i64: 128, 128>}, {pipeline_mode = #tpu.pipeline_mode<synchronous>, transform_indices = @transform_5, window_bounds = array<i64: 128, 1>}, {pipeline_mode = #tpu.pipeline_mode<synchronous>, transform_indices = @transform_6, window_bounds = array<i64: 32, 128>}, {pipeline_mode = #tpu.pipeline_mode<synchronous>, transform_indices = @transform_7, window_bounds = array<i64: 32, 1>}, {transform_indices = @transform_8, window_bounds = array<i64: 16, 8>}, {transform_indices = @transform_9, window_bounds = array<i64: 1, 8>}]} {
    %c0 = arith.constant 0 : index
    %c0_0 = arith.constant 0 : index
    %0 = vector.load %arg1[%c0, %c0_0] : memref<16x8xf32, #tpu.memory_space<vmem>>, vector<16x8xf32>
    %c0_1 = arith.constant 0 : index
    %c0_2 = arith.constant 0 : index
    %1 = vector.load %arg3[%c0_1, %c0_2] : memref<128x16xf32, #tpu.memory_space<vmem>>, vector<128x16xf32>
    %c0_3 = arith.constant 0 : index
    %c0_4 = arith.constant 0 : index
    %2 = vector.load %arg4[%c0_3, %c0_4] : memref<128x1xf32, #tpu.memory_space<vmem>>, vector<128x1xf32>
    %cst = arith.constant dense<0.000000e+00> : vector<128x8xf32>
    %3 = tpu.matmul %1, %0, %cst {dimension_numbers = #tpu.dot_dimension_numbers<[1], [0], [0], [1], [0, 0, 1, 1], [], []>} : vector<128x16xf32>, vector<16x8xf32>, vector<128x8xf32> -> vector<128x8xf32>
    %4 = vector.broadcast %2 : vector<128x1xf32> to vector<128x8xf32>
    %5 = arith.addf %3, %4 : vector<128x8xf32>
    %cst_5 = arith.constant 0.000000e+00 : f32
    %6 = vector.broadcast %cst_5 : f32 to vector<128x8xf32>
    %7 = arith.maximumf %5, %6 : vector<128x8xf32>
    %c0_6 = arith.constant 0 : index
    %c0_7 = arith.constant 0 : index
    %8 = vector.load %arg5[%c0_6, %c0_7] : memref<128x128xf32, #tpu.memory_space<vmem>>, vector<128x128xf32>
    %c0_8 = arith.constant 0 : index
    %c0_9 = arith.constant 0 : index
    %9 = vector.load %arg6[%c0_8, %c0_9] : memref<128x1xf32, #tpu.memory_space<vmem>>, vector<128x1xf32>
    %cst_10 = arith.constant dense<0.000000e+00> : vector<128x8xf32>
    %10 = tpu.matmul %8, %7, %cst_10 {dimension_numbers = #tpu.dot_dimension_numbers<[1], [0], [0], [1], [0, 0, 1, 1], [], []>} : vector<128x128xf32>, vector<128x8xf32>, vector<128x8xf32> -> vector<128x8xf32>
    %11 = vector.broadcast %9 : vector<128x1xf32> to vector<128x8xf32>
    %12 = arith.addf %10, %11 : vector<128x8xf32>
    %cst_11 = arith.constant 0.000000e+00 : f32
    %13 = vector.broadcast %cst_11 : f32 to vector<128x8xf32>
    %14 = arith.maximumf %12, %13 : vector<128x8xf32>
    %c0_12 = arith.constant 0 : index
    %c0_13 = arith.constant 0 : index
    %15 = vector.load %arg7[%c0_12, %c0_13] : memref<32x128xf32, #tpu.memory_space<vmem>>, vector<32x128xf32>
    %c0_14 = arith.constant 0 : index
    %c0_15 = arith.constant 0 : index
    %16 = vector.load %arg8[%c0_14, %c0_15] : memref<32x1xf32, #tpu.memory_space<vmem>>, vector<32x1xf32>
    %cst_16 = arith.constant dense<0.000000e+00> : vector<32x8xf32>
    %17 = tpu.matmul %15, %14, %cst_16 {dimension_numbers = #tpu.dot_dimension_numbers<[1], [0], [0], [1], [0, 0, 1, 1], [], []>} : vector<32x128xf32>, vector<128x8xf32>, vector<32x8xf32> -> vector<32x8xf32>
    %18 = vector.broadcast %16 : vector<32x1xf32> to vector<32x8xf32>
    %19 = arith.addf %17, %18 : vector<32x8xf32>
    %20 = math.tanh %19 : vector<32x8xf32>
    %21 = vector.extract_strided_slice %20 {offsets = [0, 0], sizes = [16, 8], strides = [1, 1]} : vector<32x8xf32> to vector<16x8xf32>
    %22 = vector.extract_strided_slice %20 {offsets = [16, 0], sizes = [16, 8], strides = [1, 1]} : vector<32x8xf32> to vector<16x8xf32>
    %23 = math.exp %21 : vector<16x8xf32>
    %c0_17 = arith.constant 0 : index
    %c0_18 = arith.constant 0 : index
    %24 = vector.load %arg2[%c0_17, %c0_18] : memref<16x8xf32, #tpu.memory_space<vmem>>, vector<16x8xf32>
    %25 = arith.mulf %23, %24 : vector<16x8xf32>
    %26 = arith.addf %25, %22 : vector<16x8xf32>
    %cst_19 = arith.constant dense<0.000000e+00> : vector<8xf32>
    %27 = vector.multi_reduction <add>, %21, %cst_19 [0] : vector<16x8xf32> to vector<8xf32>
    %28 = vector.shape_cast %27 : vector<8xf32> to vector<1x8xf32>
    %c0_20 = arith.constant 0 : index
    %c0_21 = arith.constant 0 : index
    %29 = vector.load %arg10[%c0_20, %c0_21] : memref<1x8xf32, #tpu.memory_space<vmem>>, vector<1x8xf32>
    tpu.vector_store %arg10[%c0_20, %c0_21], %28 {strides = array<i32>} : memref<1x8xf32, #tpu.memory_space<vmem>>, vector<1x8xf32>,
    %c0_22 = arith.constant 0 : index
    %c0_23 = arith.constant 0 : index
    %30 = vector.load %arg9[%c0_22, %c0_23] : memref<16x8xf32, #tpu.memory_space<vmem>>, vector<16x8xf32>
    tpu.vector_store %arg9[%c0_22, %c0_23], %26 {strides = array<i32>} : memref<16x8xf32, #tpu.memory_space<vmem>>, vector<16x8xf32>,
    return
  }
  func.func @transform_0(%arg0: i32) -> (i32, i32) {
    %c0_i32 = arith.constant 0 : i32
    %c0_i32_0 = arith.constant 0 : i32
    return %c0_i32, %arg0 : i32, i32
  }
  func.func @transform_1(%arg0: i32) -> (i32, i32) {
    %c0_i32 = arith.constant 0 : i32
    %c0_i32_0 = arith.constant 0 : i32
    return %c0_i32, %arg0 : i32, i32
  }
  func.func @transform_2(%arg0: i32) -> (i32, i32) {
    %c0_i32 = arith.constant 0 : i32
    %c0_i32_0 = arith.constant 0 : i32
    %c0_i32_1 = arith.constant 0 : i32
    return %c0_i32, %c0_i32_0 : i32, i32
  }
  func.func @transform_3(%arg0: i32) -> (i32, i32) {
    %c0_i32 = arith.constant 0 : i32
    %c0_i32_0 = arith.constant 0 : i32
    %c0_i32_1 = arith.constant 0 : i32
    return %c0_i32, %c0_i32_0 : i32, i32
  }
  func.func @transform_4(%arg0: i32) -> (i32, i32) {
    %c0_i32 = arith.constant 0 : i32
    %c0_i32_0 = arith.constant 0 : i32
    %c0_i32_1 = arith.constant 0 : i32
    return %c0_i32, %c0_i32_0 : i32, i32
  }
  func.func @transform_5(%arg0: i32) -> (i32, i32) {
    %c0_i32 = arith.constant 0 : i32
    %c0_i32_0 = arith.constant 0 : i32
    %c0_i32_1 = arith.constant 0 : i32
    return %c0_i32, %c0_i32_0 : i32, i32
  }
  func.func @transform_6(%arg0: i32) -> (i32, i32) {
    %c0_i32 = arith.constant 0 : i32
    %c0_i32_0 = arith.constant 0 : i32
    %c0_i32_1 = arith.constant 0 : i32
    return %c0_i32, %c0_i32_0 : i32, i32
  }
  func.func @transform_7(%arg0: i32) -> (i32, i32) {
    %c0_i32 = arith.constant 0 : i32
    %c0_i32_0 = arith.constant 0 : i32
    %c0_i32_1 = arith.constant 0 : i32
    return %c0_i32, %c0_i32_0 : i32, i32
  }
  func.func @transform_8(%arg0: i32) -> (i32, i32) {
    %c0_i32 = arith.constant 0 : i32
    %c0_i32_0 = arith.constant 0 : i32
    return %c0_i32, %arg0 : i32, i32
  }
  func.func @transform_9(%arg0: i32) -> (i32, i32) {
    %c0_i32 = arith.constant 0 : i32
    %c0_i32_0 = arith.constant 0 : i32
    return %c0_i32, %arg0 : i32, i32
  }
}

</mosaic_0001>

<llo_original>
// kernel: tpu_custom_call.1
$region0: #{tpu_custom_call.1}
  #allocation0 [shape = 'u32[]', space=smem, size = 0x4, offset = 0x4, fixed_abs, tag = 'smem constant byte address 0x4 - core index']
  #allocation1 [shape = 'u32[144,128]{1,0:T(1,128)}', space=vmem, size = 0x12000, scoped, tag = 'internal scratch']
  %s0 = inlined_call_operand.vmem [shape: f32[16,8], index: 0, kind: input, shape index: {}]
  %s1 = inlined_call_operand.vmem [shape: f32[16,8], index: 1, kind: input, shape index: {}]
  %s2 = inlined_call_operand.vmem [shape: f32[128,16], index: 2, kind: input, shape index: {}]
  %s3 = inlined_call_operand.vmem [shape: f32[128,1], index: 3, kind: input, shape index: {}]
  %s4 = inlined_call_operand.vmem [shape: f32[128,128], index: 4, kind: input, shape index: {}]
  %s5 = inlined_call_operand.vmem [shape: f32[128,1], index: 5, kind: input, shape index: {}]
  %s6 = inlined_call_operand.vmem [shape: f32[32,128], index: 6, kind: input, shape index: {}]
  %s7 = inlined_call_operand.vmem [shape: f32[32,1], index: 7, kind: input, shape index: {}]
  %s8 = inlined_call_operand.vmem [shape: f32[16,8], index: 8, kind: output, shape index: {0}]
  %s9 = inlined_call_operand.hbm [shape: f32[1,8], index: 9, kind: output, shape index: {1}]
  %10 = xla_tuple %s8, %s9
  %s11 = sld [smem:[#allocation0]]
  $region50: #{tpu_custom_call.1} parent=0
    _
  %s13 = ssub.s32 1, %s11
  %s14 = scalar_select 0, %s13, %s11
  $region1: #{tpu_custom_call.1} parent=0
    #allocation2 [shape = 'u8[512]{0}', space=vmem, size = 0x400, scoped, tag = 'output window, operand 1, single buffered']
    #allocation3 [shape = 's32[1]{0}', space=sflag, size = 0x4, scoped, tag = 'scoped memory for tpu_custom_call.1']
    %15 = vsyncpa [#allocation3], 0
    // Predicated region
    $region2: #{tpu_custom_call.1} parent=1 // pred_check
      _
    $region3: #{tpu_custom_call.1} parent=1 // pred_check_branch
      %17 = sbr.rel (0) target = $region5
    $region4: #{tpu_custom_call.1} parent=1 // pred_region
      _
    $region5: #{tpu_custom_call.1} parent=1 // pred_fallthru
      _
    // Predicated region
    $region6: #{tpu_custom_call.1} parent=1 // pred_check
      _
    $region7: #{tpu_custom_call.1} parent=1 // pred_check_branch
      %19 = sbr.rel (0) target = $region9
    $region8: #{tpu_custom_call.1} parent=1 // pred_region
      _
    $region9: #{tpu_custom_call.1} parent=1 // pred_fallthru
      _
    // Predicated region
    $region10: #{tpu_custom_call.1} parent=1 // pred_check
      _
    $region11: #{tpu_custom_call.1} parent=1 // pred_check_branch
      %21 = sbr.rel (0) target = $region13
    $region12: #{tpu_custom_call.1} parent=1 // pred_region
      _
    $region13: #{tpu_custom_call.1} parent=1 // pred_fallthru
      _
    // Predicated region
    $region14: #{tpu_custom_call.1} parent=1 // pred_check
      _
    $region15: #{tpu_custom_call.1} parent=1 // pred_check_branch
      %23 = sbr.rel (0) target = $region17
    $region16: #{tpu_custom_call.1} parent=1 // pred_region
      _
    $region17: #{tpu_custom_call.1} parent=1 // pred_fallthru
      _
    // Predicated region
    $region18: #{tpu_custom_call.1} parent=1 // pred_check
      _
    $region19: #{tpu_custom_call.1} parent=1 // pred_check_branch
      %25 = sbr.rel (0) target = $region21
    $region20: #{tpu_custom_call.1} parent=1 // pred_region
      _
    $region21: #{tpu_custom_call.1} parent=1 // pred_fallthru
      _
    // Predicated region
    $region22: #{tpu_custom_call.1} parent=1 // pred_check
      _
    $region23: #{tpu_custom_call.1} parent=1 // pred_check_branch
      %27 = sbr.rel (0) target = $region25
    $region24: #{tpu_custom_call.1} parent=1 // pred_region
      _
    $region25: #{tpu_custom_call.1} parent=1 // pred_fallthru
      _
    // Predicated region
    $region26: #{tpu_custom_call.1} parent=1 // pred_check
      _
    $region27: #{tpu_custom_call.1} parent=1 // pred_check_branch
      %29 = sbr.rel (0) target = $region29
    $region28: #{tpu_custom_call.1} parent=1 // pred_region
      _
    $region29: #{tpu_custom_call.1} parent=1 // pred_fallthru
      _
    // Predicated region
    $region30: #{tpu_custom_call.1} parent=1 // pred_check
      _
    $region31: #{tpu_custom_call.1} parent=1 // pred_check_branch
      %31 = sbr.rel (0) target = $region33
    $region32: #{tpu_custom_call.1} parent=1 // pred_region
      _
    $region33: #{tpu_custom_call.1} parent=1 // pred_fallthru
      _
    %v32 = vld [vmem:[%s0] sm:$0xff]
    %v33 = vld [vmem:[%s0 + $0x8] sm:$0xff]
    %v34 = vld [vmem:[%s2] sm:$0xff]
    %v35 = vld [vmem:[%s2 + $0x8] sm:$0xff]
    %v36 = vld [vmem:[%s2 + $0x10] sm:$0xff]
    %v37 = vld [vmem:[%s2 + $0x18] sm:$0xff]
    %v38 = vld [vmem:[%s2 + $0x20] sm:$0xff]
    %v39 = vld [vmem:[%s2 + $0x28] sm:$0xff]
    %v40 = vld [vmem:[%s2 + $0x30] sm:$0xff]
    %v41 = vld [vmem:[%s2 + $0x38] sm:$0xff]
    %v42 = vld [vmem:[%s2 + $0x40] sm:$0xff]
    %v43 = vld [vmem:[%s2 + $0x48] sm:$0xff]
    %v44 = vld [vmem:[%s2 + $0x50] sm:$0xff]
    %v45 = vld [vmem:[%s2 + $0x58] sm:$0xff]
    %v46 = vld [vmem:[%s2 + $0x60] sm:$0xff]
    %v47 = vld [vmem:[%s2 + $0x68] sm:$0xff]
    %v48 = vld [vmem:[%s2 + $0x70] sm:$0xff]
    %v49 = vld [vmem:[%s2 + $0x78] sm:$0xff]
    %v50 = vld [vmem:[%s3] sm:$0xff]
    %v51 = vld [vmem:[%s3 + $0x8] sm:$0xff]
    %v52 = vld [vmem:[%s3 + $0x10] sm:$0xff]
    %v53 = vld [vmem:[%s3 + $0x18] sm:$0xff]
    %v54 = vld [vmem:[%s3 + $0x20] sm:$0xff]
    %v55 = vld [vmem:[%s3 + $0x28] sm:$0xff]
    %v56 = vld [vmem:[%s3 + $0x30] sm:$0xff]
    %v57 = vld [vmem:[%s3 + $0x38] sm:$0xff]
    %v58 = vld [vmem:[%s3 + $0x40] sm:$0xff]
    %v59 = vld [vmem:[%s3 + $0x48] sm:$0xff]
    %v60 = vld [vmem:[%s3 + $0x50] sm:$0xff]
    %v61 = vld [vmem:[%s3 + $0x58] sm:$0xff]
    %v62 = vld [vmem:[%s3 + $0x60] sm:$0xff]
    %v63 = vld [vmem:[%s3 + $0x68] sm:$0xff]
    %v64 = vld [vmem:[%s3 + $0x70] sm:$0xff]
    %v65 = vld [vmem:[%s3 + $0x78] sm:$0xff]
    %67 = vset.pattern.permute.xlu0 0
    %68 = vperm.xlu0 %67, %v50
    %v69 = vpop.permute.xlu0 %68
    %72 = vset.pattern.permute.xlu0 0
    %73 = vperm.xlu0 %72, %v51
    %v74 = vpop.permute.xlu0 %73
    %77 = vset.pattern.permute.xlu0 0
    %78 = vperm.xlu0 %77, %v52
    %v79 = vpop.permute.xlu0 %78
    %82 = vset.pattern.permute.xlu0 0
    %83 = vperm.xlu0 %82, %v53
    %v84 = vpop.permute.xlu0 %83
    %87 = vset.pattern.permute.xlu0 0
    %88 = vperm.xlu0 %87, %v54
    %v89 = vpop.permute.xlu0 %88
    %92 = vset.pattern.permute.xlu0 0
    %93 = vperm.xlu0 %92, %v55
    %v94 = vpop.permute.xlu0 %93
    %97 = vset.pattern.permute.xlu0 0
    %98 = vperm.xlu0 %97, %v56
    %v99 = vpop.permute.xlu0 %98
    %102 = vset.pattern.permute.xlu0 0
    %103 = vperm.xlu0 %102, %v57
    %v104 = vpop.permute.xlu0 %103
    %107 = vset.pattern.permute.xlu0 0
    %108 = vperm.xlu0 %107, %v58
    %v109 = vpop.permute.xlu0 %108
    %112 = vset.pattern.permute.xlu0 0
    %113 = vperm.xlu0 %112, %v59
    %v114 = vpop.permute.xlu0 %113
    %117 = vset.pattern.permute.xlu0 0
    %118 = vperm.xlu0 %117, %v60
    %v119 = vpop.permute.xlu0 %118
    %122 = vset.pattern.permute.xlu0 0
    %123 = vperm.xlu0 %122, %v61
    %v124 = vpop.permute.xlu0 %123
    %127 = vset.pattern.permute.xlu0 0
    %128 = vperm.xlu0 %127, %v62
    %v129 = vpop.permute.xlu0 %128
    %132 = vset.pattern.permute.xlu0 0
    %133 = vperm.xlu0 %132, %v63
    %v134 = vpop.permute.xlu0 %133
    %137 = vset.pattern.permute.xlu0 0
    %138 = vperm.xlu0 %137, %v64
    %v139 = vpop.permute.xlu0 %138
    %142 = vset.pattern.permute.xlu0 0
    %143 = vperm.xlu0 %142, %v65
    %v144 = vpop.permute.xlu0 %143
    %vm146 = vcmask 130048
    %v148 = vsel %vm146, %v34, 0
    %v151 = vsel %vm146, %v35, 0
    %v154 = vsel %vm146, %v36, 0
    %v157 = vsel %vm146, %v37, 0
    %v160 = vsel %vm146, %v38, 0
    %v163 = vsel %vm146, %v39, 0
    %v166 = vsel %vm146, %v40, 0
    %v169 = vsel %vm146, %v41, 0
    %v172 = vsel %vm146, %v42, 0
    %v175 = vsel %vm146, %v43, 0
    %v178 = vsel %vm146, %v44, 0
    %v181 = vsel %vm146, %v45, 0
    %v184 = vsel %vm146, %v46, 0
    %v187 = vsel %vm146, %v47, 0
    %v190 = vsel %vm146, %v48, 0
    %v193 = vsel %vm146, %v49, 0
    %195 = vmatprep.subr.mxu0 0.0
    %196 = vmatpush1.msra.mxu0 0.0
    %197 = vmatprep.subr.mxu0 0.0
    %198 = vmatpush1.msra.mxu0 0.0
    %199 = vmatprep.subr.mxu0 0.0
    %200 = vmatpush1.msra.mxu0 0.0
    %201 = vmatprep.subr.mxu0 0.0
    %202 = vmatpush1.msra.mxu0 0.0
    %203 = vmatprep.subr.mxu0 0.0
    %204 = vmatpush1.msra.mxu0 0.0
    %205 = vmatprep.subr.mxu0 0.0
    %206 = vmatpush1.msra.mxu0 0.0
    %207 = vmatprep.subr.mxu0 0.0
    %208 = vmatpush1.msra.mxu0 0.0
    %209 = vmatprep.subr.mxu0 0.0
    %210 = vmatpush1.msra.mxu0 0.0
    %211 = vmatprep.subr.mxu0 0.0
    %212 = vmatpush1.msra.mxu0 0.0
    %213 = vmatprep.subr.mxu0 0.0
    %214 = vmatpush1.msra.mxu0 0.0
    %215 = vmatprep.subr.mxu0 0.0
    %216 = vmatpush1.msra.mxu0 0.0
    %217 = vmatprep.subr.mxu0 0.0
    %218 = vmatpush1.msra.mxu0 0.0
    %219 = vmatprep.subr.mxu0 0.0
    %220 = vmatpush1.msra.mxu0 0.0
    %221 = vmatprep.subr.mxu0 0.0
    %222 = vmatpush1.msra.mxu0 0.0
    %223 = vmatprep.subr.mxu0 0.0
    %224 = vmatpush1.msra.mxu0 %v33
    %225 = vmatprep.subr.mxu0 0.0
    %226 = vmatpush1.msra.mxu0 %v32
    %227 = vmatprep.subr.mxu0 0.0
    %228 = vmatpush2.msra.mxu0 0.0
    %229 = vmatprep.subr.mxu0 0.0
    %230 = vmatpush2.msra.mxu0 0.0
    %231 = vmatprep.subr.mxu0 0.0
    %232 = vmatpush2.msra.mxu0 0.0
    %233 = vmatprep.subr.mxu0 0.0
    %234 = vmatpush2.msra.mxu0 0.0
    %235 = vmatprep.subr.mxu0 0.0
    %236 = vmatpush2.msra.mxu0 0.0
    %237 = vmatprep.subr.mxu0 0.0
    %238 = vmatpush2.msra.mxu0 0.0
    %239 = vmatprep.subr.mxu0 0.0
    %240 = vmatpush2.msra.mxu0 0.0
    %241 = vmatprep.subr.mxu0 0.0
    %242 = vmatpush2.msra.mxu0 0.0
    %243 = vmatprep.subr.mxu0 0.0
    %244 = vmatpush2.msra.mxu0 0.0
    %245 = vmatprep.subr.mxu0 0.0
    %246 = vmatpush2.msra.mxu0 0.0
    %247 = vmatprep.subr.mxu0 0.0
    %248 = vmatpush2.msra.mxu0 0.0
    %249 = vmatprep.subr.mxu0 0.0
    %250 = vmatpush2.msra.mxu0 0.0
    %251 = vmatprep.subr.mxu0 0.0
    %252 = vmatpush2.msra.mxu0 0.0
    %253 = vmatprep.subr.mxu0 0.0
    %254 = vmatpush2.msra.mxu0 0.0
    %255 = vmatprep.subr.mxu0 0.0
    %256 = vmatpush2.msra.mxu0 0.0
    %257 = vmatprep.subr.mxu0 0.0
    %258 = vmatpush2.msra.mxu0 0.0
    %259 = vmatprep.mubr.f32.mxu0 0.0
    %260 = vmatmul.mubr.f32.gmra.mxu0 %v148
    %v261 = vpop.f32.mrf.mxu0
    %v262 = vadd.f32 %v69, %v261
    %v263 = vpop.f32.mrf.mxu0
    %264 = vmatprep.mubr.f32.mxu0 0.0
    %265 = vmatmul.mubr.f32.gmra.mxu0 %v151
    %v266 = vpop.f32.mrf.mxu0
    %v267 = vadd.f32 %v74, %v266
    %v268 = vpop.f32.mrf.mxu0
    %269 = vmatprep.mubr.f32.mxu0 0.0
    %270 = vmatmul.mubr.f32.gmra.mxu0 %v154
    %v271 = vpop.f32.mrf.mxu0
    %v272 = vadd.f32 %v79, %v271
    %v273 = vpop.f32.mrf.mxu0
    %274 = vmatprep.mubr.f32.mxu0 0.0
    %275 = vmatmul.mubr.f32.gmra.mxu0 %v157
    %v276 = vpop.f32.mrf.mxu0
    %v277 = vadd.f32 %v84, %v276
    %v278 = vpop.f32.mrf.mxu0
    %279 = vmatprep.mubr.f32.mxu0 0.0
    %280 = vmatmul.mubr.f32.gmra.mxu0 %v160
    %v281 = vpop.f32.mrf.mxu0
    %v282 = vadd.f32 %v89, %v281
    %v283 = vpop.f32.mrf.mxu0
    %284 = vmatprep.mubr.f32.mxu0 0.0
    %285 = vmatmul.mubr.f32.gmra.mxu0 %v163
    %v286 = vpop.f32.mrf.mxu0
    %v287 = vadd.f32 %v94, %v286
    %v288 = vpop.f32.mrf.mxu0
    %289 = vmatprep.mubr.f32.mxu0 0.0
    %290 = vmatmul.mubr.f32.gmra.mxu0 %v166
    %v291 = vpop.f32.mrf.mxu0
    %v292 = vadd.f32 %v99, %v291
    %v293 = vpop.f32.mrf.mxu0
    %294 = vmatprep.mubr.f32.mxu0 0.0
    %295 = vmatmul.mubr.f32.gmra.mxu0 %v169
    %v296 = vpop.f32.mrf.mxu0
    %v297 = vadd.f32 %v104, %v296
    %v298 = vpop.f32.mrf.mxu0
    %299 = vmatprep.mubr.f32.mxu0 0.0
    %300 = vmatmul.mubr.f32.gmra.mxu0 %v172
    %v301 = vpop.f32.mrf.mxu0
    %v302 = vadd.f32 %v109, %v301
    %v303 = vpop.f32.mrf.mxu0
    %304 = vmatprep.mubr.f32.mxu0 0.0
    %305 = vmatmul.mubr.f32.gmra.mxu0 %v175
    %v306 = vpop.f32.mrf.mxu0
    %v307 = vadd.f32 %v114, %v306
    %v308 = vpop.f32.mrf.mxu0
    %309 = vmatprep.mubr.f32.mxu0 0.0
    %310 = vmatmul.mubr.f32.gmra.mxu0 %v178
    %v311 = vpop.f32.mrf.mxu0
    %v312 = vadd.f32 %v119, %v311
    %v313 = vpop.f32.mrf.mxu0
    %314 = vmatprep.mubr.f32.mxu0 0.0
    %315 = vmatmul.mubr.f32.gmra.mxu0 %v181
    %v316 = vpop.f32.mrf.mxu0
    %v317 = vadd.f32 %v124, %v316
    %v318 = vpop.f32.mrf.mxu0
    %319 = vmatprep.mubr.f32.mxu0 0.0
    %320 = vmatmul.mubr.f32.gmra.mxu0 %v184
    %v321 = vpop.f32.mrf.mxu0
    %v322 = vadd.f32 %v129, %v321
    %v323 = vpop.f32.mrf.mxu0
    %324 = vmatprep.mubr.f32.mxu0 0.0
    %325 = vmatmul.mubr.f32.gmra.mxu0 %v187
    %v326 = vpop.f32.mrf.mxu0
    %v327 = vadd.f32 %v134, %v326
    %v328 = vpop.f32.mrf.mxu0
    %329 = vmatprep.mubr.f32.mxu0 0.0
    %330 = vmatmul.mubr.f32.gmra.mxu0 %v190
    %v331 = vpop.f32.mrf.mxu0
    %v332 = vadd.f32 %v139, %v331
    %v333 = vpop.f32.mrf.mxu0
    %334 = vmatprep.mubr.f32.mxu0 0.0
    %335 = vmatmul.mubr.f32.gmra.mxu0 %v193
    %v336 = vpop.f32.mrf.mxu0
    %v337 = vadd.f32 %v144, %v336
    %v338 = vpop.f32.mrf.mxu0
    %339 = vdwg.mxu0
    %v340 = vmax.f32 %v262, 0.0
    %v341 = vmax.f32 %v267, 0.0
    %v342 = vmax.f32 %v272, 0.0
    %v343 = vmax.f32 %v277, 0.0
    %v344 = vmax.f32 %v282, 0.0
    %v345 = vmax.f32 %v287, 0.0
    %v346 = vmax.f32 %v292, 0.0
    %v347 = vmax.f32 %v297, 0.0
    %v348 = vmax.f32 %v302, 0.0
    %v349 = vmax.f32 %v307, 0.0
    %v350 = vmax.f32 %v312, 0.0
    %v351 = vmax.f32 %v317, 0.0
    %v352 = vmax.f32 %v322, 0.0
    %v353 = vmax.f32 %v327, 0.0
    %v354 = vmax.f32 %v332, 0.0
    %v355 = vmax.f32 %v337, 0.0
    %v356 = vld [vmem:[%s4] sm:$0xff]
    %v357 = vld [vmem:[%s4 + $0x8] sm:$0xff]
    %v358 = vld [vmem:[%s4 + $0x10] sm:$0xff]
    %v359 = vld [vmem:[%s4 + $0x18] sm:$0xff]
    %v360 = vld [vmem:[%s4 + $0x20] sm:$0xff]
    %v361 = vld [vmem:[%s4 + $0x28] sm:$0xff]
    %v362 = vld [vmem:[%s4 + $0x30] sm:$0xff]
    %v363 = vld [vmem:[%s4 + $0x38] sm:$0xff]
    %v364 = vld [vmem:[%s4 + $0x40] sm:$0xff]
    %v365 = vld [vmem:[%s4 + $0x48] sm:$0xff]
    %v366 = vld [vmem:[%s4 + $0x50] sm:$0xff]
    %v367 = vld [vmem:[%s4 + $0x58] sm:$0xff]
    %v368 = vld [vmem:[%s4 + $0x60] sm:$0xff]
    %v369 = vld [vmem:[%s4 + $0x68] sm:$0xff]
    %v370 = vld [vmem:[%s4 + $0x70] sm:$0xff]
    %v371 = vld [vmem:[%s4 + $0x78] sm:$0xff]
    %v372 = vld [vmem:[%s5] sm:$0xff]
    %v373 = vld [vmem:[%s5 + $0x8] sm:$0xff]
    %v374 = vld [vmem:[%s5 + $0x10] sm:$0xff]
    %v375 = vld [vmem:[%s5 + $0x18] sm:$0xff]
    %v376 = vld [vmem:[%s5 + $0x20] sm:$0xff]
    %v377 = vld [vmem:[%s5 + $0x28] sm:$0xff]
    %v378 = vld [vmem:[%s5 + $0x30] sm:$0xff]
    %v379 = vld [vmem:[%s5 + $0x38] sm:$0xff]
    %v380 = vld [vmem:[%s5 + $0x40] sm:$0xff]
    %v381 = vld [vmem:[%s5 + $0x48] sm:$0xff]
    %v382 = vld [vmem:[%s5 + $0x50] sm:$0xff]
    %v383 = vld [vmem:[%s5 + $0x58] sm:$0xff]
    %v384 = vld [vmem:[%s5 + $0x60] sm:$0xff]
    %v385 = vld [vmem:[%s5 + $0x68] sm:$0xff]
    %v386 = vld [vmem:[%s5 + $0x70] sm:$0xff]
    %v387 = vld [vmem:[%s5 + $0x78] sm:$0xff]
    %389 = vset.pattern.permute.xlu0 0
    %390 = vperm.xlu0 %389, %v372
    %v391 = vpop.permute.xlu0 %390
    %394 = vset.pattern.permute.xlu0 0
    %395 = vperm.xlu0 %394, %v373
    %v396 = vpop.permute.xlu0 %395
    %399 = vset.pattern.permute.xlu0 0
    %400 = vperm.xlu0 %399, %v374
    %v401 = vpop.permute.xlu0 %400
    %404 = vset.pattern.permute.xlu0 0
    %405 = vperm.xlu0 %404, %v375
    %v406 = vpop.permute.xlu0 %405
    %409 = vset.pattern.permute.xlu0 0
    %410 = vperm.xlu0 %409, %v376
    %v411 = vpop.permute.xlu0 %410
    %414 = vset.pattern.permute.xlu0 0
    %415 = vperm.xlu0 %414, %v377
    %v416 = vpop.permute.xlu0 %415
    %419 = vset.pattern.permute.xlu0 0
    %420 = vperm.xlu0 %419, %v378
    %v421 = vpop.permute.xlu0 %420
    %424 = vset.pattern.permute.xlu0 0
    %425 = vperm.xlu0 %424, %v379
    %v426 = vpop.permute.xlu0 %425
    %429 = vset.pattern.permute.xlu0 0
    %430 = vperm.xlu0 %429, %v380
    %v431 = vpop.permute.xlu0 %430
    %434 = vset.pattern.permute.xlu0 0
    %435 = vperm.xlu0 %434, %v381
    %v436 = vpop.permute.xlu0 %435
    %439 = vset.pattern.permute.xlu0 0
    %440 = vperm.xlu0 %439, %v382
    %v441 = vpop.permute.xlu0 %440
    %444 = vset.pattern.permute.xlu0 0
    %445 = vperm.xlu0 %444, %v383
    %v446 = vpop.permute.xlu0 %445
    %449 = vset.pattern.permute.xlu0 0
    %450 = vperm.xlu0 %449, %v384
    %v451 = vpop.permute.xlu0 %450
    %454 = vset.pattern.permute.xlu0 0
    %455 = vperm.xlu0 %454, %v385
    %v456 = vpop.permute.xlu0 %455
    %459 = vset.pattern.permute.xlu0 0
    %460 = vperm.xlu0 %459, %v386
    %v461 = vpop.permute.xlu0 %460
    %464 = vset.pattern.permute.xlu0 0
    %465 = vperm.xlu0 %464, %v387
    %v466 = vpop.permute.xlu0 %465
    %468 = vmatprep.subr.mxu0 0.0
    %469 = vmatpush1.msra.mxu0 %v355
    %470 = vmatprep.subr.mxu0 0.0
    %471 = vmatpush1.msra.mxu0 %v354
    %472 = vmatprep.subr.mxu0 0.0
    %473 = vmatpush1.msra.mxu0 %v353
    %474 = vmatprep.subr.mxu0 0.0
    %475 = vmatpush1.msra.mxu0 %v352
    %476 = vmatprep.subr.mxu0 0.0
    %477 = vmatpush1.msra.mxu0 %v351
    %478 = vmatprep.subr.mxu0 0.0
    %479 = vmatpush1.msra.mxu0 %v350
    %480 = vmatprep.subr.mxu0 0.0
    %481 = vmatpush1.msra.mxu0 %v349
    %482 = vmatprep.subr.mxu0 0.0
    %483 = vmatpush1.msra.mxu0 %v348
    %484 = vmatprep.subr.mxu0 0.0
    %485 = vmatpush1.msra.mxu0 %v347
    %486 = vmatprep.subr.mxu0 0.0
    %487 = vmatpush1.msra.mxu0 %v346
    %488 = vmatprep.subr.mxu0 0.0
    %489 = vmatpush1.msra.mxu0 %v345
    %490 = vmatprep.subr.mxu0 0.0
    %491 = vmatpush1.msra.mxu0 %v344
    %492 = vmatprep.subr.mxu0 0.0
    %493 = vmatpush1.msra.mxu0 %v343
    %494 = vmatprep.subr.mxu0 0.0
    %495 = vmatpush1.msra.mxu0 %v342
    %496 = vmatprep.subr.mxu0 0.0
    %497 = vmatpush1.msra.mxu0 %v341
    %498 = vmatprep.subr.mxu0 0.0
    %499 = vmatpush1.msra.mxu0 %v340
    %500 = vmatprep.subr.mxu0 0.0
    %501 = vmatpush2.msra.mxu0 0.0
    %502 = vmatprep.subr.mxu0 0.0
    %503 = vmatpush2.msra.mxu0 0.0
    %504 = vmatprep.subr.mxu0 0.0
    %505 = vmatpush2.msra.mxu0 0.0
    %506 = vmatprep.subr.mxu0 0.0
    %507 = vmatpush2.msra.mxu0 0.0
    %508 = vmatprep.subr.mxu0 0.0
    %509 = vmatpush2.msra.mxu0 0.0
    %510 = vmatprep.subr.mxu0 0.0
    %511 = vmatpush2.msra.mxu0 0.0
    %512 = vmatprep.subr.mxu0 0.0
    %513 = vmatpush2.msra.mxu0 0.0
    %514 = vmatprep.subr.mxu0 0.0
    %515 = vmatpush2.msra.mxu0 0.0
    %516 = vmatprep.subr.mxu0 0.0
    %517 = vmatpush2.msra.mxu0 0.0
    %518 = vmatprep.subr.mxu0 0.0
    %519 = vmatpush2.msra.mxu0 0.0
    %520 = vmatprep.subr.mxu0 0.0
    %521 = vmatpush2.msra.mxu0 0.0
    %522 = vmatprep.subr.mxu0 0.0
    %523 = vmatpush2.msra.mxu0 0.0
    %524 = vmatprep.subr.mxu0 0.0
    %525 = vmatpush2.msra.mxu0 0.0
    %526 = vmatprep.subr.mxu0 0.0
    %527 = vmatpush2.msra.mxu0 0.0
    %528 = vmatprep.subr.mxu0 0.0
    %529 = vmatpush2.msra.mxu0 0.0
    %530 = vmatprep.subr.mxu0 0.0
    %531 = vmatpush2.msra.mxu0 0.0
    %532 = vmatprep.mubr.f32.mxu0 0.0
    %533 = vmatmul.mubr.f32.gmra.mxu0 %v356
    %v534 = vpop.f32.mrf.mxu0
    %v535 = vadd.f32 %v391, %v534
    %v536 = vpop.f32.mrf.mxu0
    %537 = vmatprep.mubr.f32.mxu0 0.0
    %538 = vmatmul.mubr.f32.gmra.mxu0 %v357
    %v539 = vpop.f32.mrf.mxu0
    %v540 = vadd.f32 %v396, %v539
    %v541 = vpop.f32.mrf.mxu0
    %542 = vmatprep.mubr.f32.mxu0 0.0
    %543 = vmatmul.mubr.f32.gmra.mxu0 %v358
    %v544 = vpop.f32.mrf.mxu0
    %v545 = vadd.f32 %v401, %v544
    %v546 = vpop.f32.mrf.mxu0
    %547 = vmatprep.mubr.f32.mxu0 0.0
    %548 = vmatmul.mubr.f32.gmra.mxu0 %v359
    %v549 = vpop.f32.mrf.mxu0
    %v550 = vadd.f32 %v406, %v549
    %v551 = vpop.f32.mrf.mxu0
    %552 = vmatprep.mubr.f32.mxu0 0.0
    %553 = vmatmul.mubr.f32.gmra.mxu0 %v360
    %v554 = vpop.f32.mrf.mxu0
    %v555 = vadd.f32 %v411, %v554
    %v556 = vpop.f32.mrf.mxu0
    %557 = vmatprep.mubr.f32.mxu0 0.0
    %558 = vmatmul.mubr.f32.gmra.mxu0 %v361
    %v559 = vpop.f32.mrf.mxu0
    %v560 = vadd.f32 %v416, %v559
    %v561 = vpop.f32.mrf.mxu0
    %562 = vmatprep.mubr.f32.mxu0 0.0
    %563 = vmatmul.mubr.f32.gmra.mxu0 %v362
    %v564 = vpop.f32.mrf.mxu0
    %v565 = vadd.f32 %v421, %v564
    %v566 = vpop.f32.mrf.mxu0
    %567 = vmatprep.mubr.f32.mxu0 0.0
    %568 = vmatmul.mubr.f32.gmra.mxu0 %v363
    %v569 = vpop.f32.mrf.mxu0
    %v570 = vadd.f32 %v426, %v569
    %v571 = vpop.f32.mrf.mxu0
    %572 = vmatprep.mubr.f32.mxu0 0.0
    %573 = vmatmul.mubr.f32.gmra.mxu0 %v364
    %v574 = vpop.f32.mrf.mxu0
    %v575 = vadd.f32 %v431, %v574
    %v576 = vpop.f32.mrf.mxu0
    %577 = vmatprep.mubr.f32.mxu0 0.0
    %578 = vmatmul.mubr.f32.gmra.mxu0 %v365
    %v579 = vpop.f32.mrf.mxu0
    %v580 = vadd.f32 %v436, %v579
    %v581 = vpop.f32.mrf.mxu0
    %582 = vmatprep.mubr.f32.mxu0 0.0
    %583 = vmatmul.mubr.f32.gmra.mxu0 %v366
    %v584 = vpop.f32.mrf.mxu0
    %v585 = vadd.f32 %v441, %v584
    %v586 = vpop.f32.mrf.mxu0
    %587 = vmatprep.mubr.f32.mxu0 0.0
    %588 = vmatmul.mubr.f32.gmra.mxu0 %v367
    %v589 = vpop.f32.mrf.mxu0
    %v590 = vadd.f32 %v446, %v589
    %v591 = vpop.f32.mrf.mxu0
    %592 = vmatprep.mubr.f32.mxu0 0.0
    %593 = vmatmul.mubr.f32.gmra.mxu0 %v368
    %v594 = vpop.f32.mrf.mxu0
    %v595 = vadd.f32 %v451, %v594
    %v596 = vpop.f32.mrf.mxu0
    %597 = vmatprep.mubr.f32.mxu0 0.0
    %598 = vmatmul.mubr.f32.gmra.mxu0 %v369
    %v599 = vpop.f32.mrf.mxu0
    %v600 = vadd.f32 %v456, %v599
    %v601 = vpop.f32.mrf.mxu0
    %602 = vmatprep.mubr.f32.mxu0 0.0
    %603 = vmatmul.mubr.f32.gmra.mxu0 %v370
    %v604 = vpop.f32.mrf.mxu0
    %v605 = vadd.f32 %v461, %v604
    %v606 = vpop.f32.mrf.mxu0
    %607 = vmatprep.mubr.f32.mxu0 0.0
    %608 = vmatmul.mubr.f32.gmra.mxu0 %v371
    %v609 = vpop.f32.mrf.mxu0
    %v610 = vadd.f32 %v466, %v609
    %v611 = vpop.f32.mrf.mxu0
    %612 = vdwg.mxu0
    %v613 = vmax.f32 %v535, 0.0
    %v614 = vmax.f32 %v540, 0.0
    %v615 = vmax.f32 %v545, 0.0
    %v616 = vmax.f32 %v550, 0.0
    %v617 = vmax.f32 %v555, 0.0
    %v618 = vmax.f32 %v560, 0.0
    %v619 = vmax.f32 %v565, 0.0
    %v620 = vmax.f32 %v570, 0.0
    %v621 = vmax.f32 %v575, 0.0
    %v622 = vmax.f32 %v580, 0.0
    %v623 = vmax.f32 %v585, 0.0
    %v624 = vmax.f32 %v590, 0.0
    %v625 = vmax.f32 %v595, 0.0
    %v626 = vmax.f32 %v600, 0.0
    %v627 = vmax.f32 %v605, 0.0
    %v628 = vmax.f32 %v610, 0.0
    %v629 = vld [vmem:[%s6] sm:$0xff]
    %v630 = vld [vmem:[%s6 + $0x8] sm:$0xff]
    %v631 = vld [vmem:[%s6 + $0x10] sm:$0xff]
    %v632 = vld [vmem:[%s6 + $0x18] sm:$0xff]
    %v633 = vld [vmem:[%s7] sm:$0xff]
    %v634 = vld [vmem:[%s7 + $0x8] sm:$0xff]
    %v635 = vld [vmem:[%s7 + $0x10] sm:$0xff]
    %v636 = vld [vmem:[%s7 + $0x18] sm:$0xff]
    %638 = vset.pattern.permute.xlu0 0
    %639 = vperm.xlu0 %638, %v633
    %v640 = vpop.permute.xlu0 %639
    %643 = vset.pattern.permute.xlu0 0
    %644 = vperm.xlu0 %643, %v634
    %v645 = vpop.permute.xlu0 %644
    %648 = vset.pattern.permute.xlu0 0
    %649 = vperm.xlu0 %648, %v635
    %v650 = vpop.permute.xlu0 %649
    %653 = vset.pattern.permute.xlu0 0
    %654 = vperm.xlu0 %653, %v636
    %v655 = vpop.permute.xlu0 %654
    %657 = vmatprep.subr.mxu0 0.0
    %658 = vmatpush1.msra.mxu0 %v628
    %659 = vmatprep.subr.mxu0 0.0
    %660 = vmatpush1.msra.mxu0 %v627
    %661 = vmatprep.subr.mxu0 0.0
    %662 = vmatpush1.msra.mxu0 %v626
    %663 = vmatprep.subr.mxu0 0.0
    %664 = vmatpush1.msra.mxu0 %v625
    %665 = vmatprep.subr.mxu0 0.0
    %666 = vmatpush1.msra.mxu0 %v624
    %667 = vmatprep.subr.mxu0 0.0
    %668 = vmatpush1.msra.mxu0 %v623
    %669 = vmatprep.subr.mxu0 0.0
    %670 = vmatpush1.msra.mxu0 %v622
    %671 = vmatprep.subr.mxu0 0.0
    %672 = vmatpush1.msra.mxu0 %v621
    %673 = vmatprep.subr.mxu0 0.0
    %674 = vmatpush1.msra.mxu0 %v620
    %675 = vmatprep.subr.mxu0 0.0
    %676 = vmatpush1.msra.mxu0 %v619
    %677 = vmatprep.subr.mxu0 0.0
    %678 = vmatpush1.msra.mxu0 %v618
    %679 = vmatprep.subr.mxu0 0.0
    %680 = vmatpush1.msra.mxu0 %v617
    %681 = vmatprep.subr.mxu0 0.0
    %682 = vmatpush1.msra.mxu0 %v616
    %683 = vmatprep.subr.mxu0 0.0
    %684 = vmatpush1.msra.mxu0 %v615
    %685 = vmatprep.subr.mxu0 0.0
    %686 = vmatpush1.msra.mxu0 %v614
    %687 = vmatprep.subr.mxu0 0.0
    %688 = vmatpush1.msra.mxu0 %v613
    %689 = vmatprep.subr.mxu0 0.0
    %690 = vmatpush2.msra.mxu0 0.0
    %691 = vmatprep.subr.mxu0 0.0
    %692 = vmatpush2.msra.mxu0 0.0
    %693 = vmatprep.subr.mxu0 0.0
    %694 = vmatpush2.msra.mxu0 0.0
    %695 = vmatprep.subr.mxu0 0.0
    %696 = vmatpush2.msra.mxu0 0.0
    %697 = vmatprep.subr.mxu0 0.0
    %698 = vmatpush2.msra.mxu0 0.0
    %699 = vmatprep.subr.mxu0 0.0
    %700 = vmatpush2.msra.mxu0 0.0
    %701 = vmatprep.subr.mxu0 0.0
    %702 = vmatpush2.msra.mxu0 0.0
    %703 = vmatprep.subr.mxu0 0.0
    %704 = vmatpush2.msra.mxu0 0.0
    %705 = vmatprep.subr.mxu0 0.0
    %706 = vmatpush2.msra.mxu0 0.0
    %707 = vmatprep.subr.mxu0 0.0
    %708 = vmatpush2.msra.mxu0 0.0
    %709 = vmatprep.subr.mxu0 0.0
    %710 = vmatpush2.msra.mxu0 0.0
    %711 = vmatprep.subr.mxu0 0.0
    %712 = vmatpush2.msra.mxu0 0.0
    %713 = vmatprep.subr.mxu0 0.0
    %714 = vmatpush2.msra.mxu0 0.0
    %715 = vmatprep.subr.mxu0 0.0
    %716 = vmatpush2.msra.mxu0 0.0
    %717 = vmatprep.subr.mxu0 0.0
    %718 = vmatpush2.msra.mxu0 0.0
    %719 = vmatprep.subr.mxu0 0.0
    %720 = vmatpush2.msra.mxu0 0.0
    %721 = vmatprep.mubr.f32.mxu0 0.0
    %722 = vmatmul.mubr.f32.gmra.mxu0 %v629
    %v723 = vpop.f32.mrf.mxu0
    %v724 = vadd.f32 %v640, %v723
    %v725 = vpop.f32.mrf.mxu0
    %726 = vmatprep.mubr.f32.mxu0 0.0
    %727 = vmatmul.mubr.f32.gmra.mxu0 %v630
    %v728 = vpop.f32.mrf.mxu0
    %v729 = vadd.f32 %v645, %v728
    %v730 = vpop.f32.mrf.mxu0
    %731 = vmatprep.mubr.f32.mxu0 0.0
    %732 = vmatmul.mubr.f32.gmra.mxu0 %v631
    %v733 = vpop.f32.mrf.mxu0
    %v734 = vadd.f32 %v650, %v733
    %v735 = vpop.f32.mrf.mxu0
    %736 = vmatprep.mubr.f32.mxu0 0.0
    %737 = vmatmul.mubr.f32.gmra.mxu0 %v632
    %v738 = vpop.f32.mrf.mxu0
    %v739 = vadd.f32 %v655, %v738
    %v740 = vpop.f32.mrf.mxu0
    %741 = vdwg.mxu0
    %v742 = vtanh.pop %v724
    %v743 = vtanh.pop %v729
    %v744 = vtanh.pop %v734
    %v745 = vtanh.pop %v739
    %v746 = vmul.f32 %v742, 1.442695
    %v747 = vpow.pop %v746
    %v748 = vmul.f32 %v743, 1.442695
    %v749 = vpow.pop %v748
    %v750 = vld [vmem:[%s1] sm:$0xff]
    %v751 = vld [vmem:[%s1 + $0x8] sm:$0xff]
    %v752 = vmul.f32 %v747, %v750
    %v753 = vmul.f32 %v749, %v751
    %v754 = vadd.f32 %v752, %v744
    %v755 = vadd.f32 %v753, %v745
    %vm756 = vcmask 64512
    %v757 = vsel %vm756, %v742, 0.0
    %v758 = vsel %vm756, %v743, 0.0
    %v759 = vadd.f32 %v757, %v758
    %v760 = vrot.slane %v759, 4
    %v761 = vadd.f32 %v759, %v760
    %v762 = vrot.slane %v761, 2
    %v763 = vadd.f32 %v761, %v762
    %v764 = vrot.slane %v763, 1
    %v765 = vadd.f32 %v763, %v764
    %vm766 = vcmask 57344
    %767 = vst.msk [vmem:[#allocation2] sm:$0x1] %vm766, %v765
    %768 = vst.msk [vmem:[%s8] sm:$0xff] %vm756, %v754
    %769 = vst.msk [vmem:[%s8 + $0x8] sm:$0xff] %vm756, %v755
    // Predicated region
    $region34: #{tpu_custom_call.1} parent=1 // pred_check
      _
    $region35: #{tpu_custom_call.1} parent=1 // pred_check_branch
      %771 = sbr.rel (0) target = $region37
    $region36: #{tpu_custom_call.1} parent=1 // pred_region
      _
    $region37: #{tpu_custom_call.1} parent=1 // pred_fallthru
      _
    // Predicated region
    $region38: #{tpu_custom_call.1} parent=1 // pred_check
      _
    $region39: #{tpu_custom_call.1} parent=1 // pred_check_branch
      %773 = sbr.rel (0) target = $region41
    $region40: #{tpu_custom_call.1} parent=1 // pred_region
      %s775 = ssub.s32 16, 16
      %776 = vsyncadd [#allocation3], %s775
      %s778 = sshll.u32 [#allocation2], 4
      %s779 = int_to_ptr.vmem [resolvable:$true] %s778
      %781 = dma.vmem_to_hbm [thread:$0]  %s779, 16, %s9, [#allocation3]
    $region41: #{tpu_custom_call.1} parent=1 // pred_fallthru
      _
    // Predicated region
    $region42: #{tpu_custom_call.1} parent=1 // pred_check
      _
    $region43: #{tpu_custom_call.1} parent=1 // pred_check_branch
      %783 = sbr.rel (0) target = $region45
    $region44: #{tpu_custom_call.1} parent=1 // pred_region
      _
    $region45: #{tpu_custom_call.1} parent=1 // pred_fallthru
      _
    // Predicated region
    $region46: #{tpu_custom_call.1} parent=1 // pred_check
      _
    $region47: #{tpu_custom_call.1} parent=1 // pred_check_branch
      %785 = sbr.rel (0) target = $region49
    $region48: #{tpu_custom_call.1} parent=1 // pred_region
      %786 = dma.done [#allocation3], 16
    $region49: #{tpu_custom_call.1} parent=1 // pred_fallthru
      _
    %787 = vsyncpa [#allocation3], 1

</llo_original>
